<compile_context>
chip_gen: v5e
topology: v5e:2x2
jax: 0.10.0
libtpu: 0.0.40
codegen_flags: <defaults>
</compile_context>

<pallas_src>
import jax
import jax.numpy as jnp
from jax import lax
from jax.experimental import pallas as pl
from jax.experimental.pallas import tpu as pltpu

HIDDEN = 32
NUM_LAYERS = 2
INPUT_SIZE = 1
_SUBLANES = 8
# Fold 0.5 into i/f/o pre-activations so sigmoid(x) = 0.5*tanh(x/2) + 0.5 comes from a single tanh.
_GATE_SCALES = (0.5, 0.5, 1.0, 0.5)   # PyTorch gate order: i, f, g, o


def _lstm_kernel(x_ref, w_ref, w_in_ref, b_ref, fcw_ref, fcb_ref, out_ref, add_ref):
    """Single invocation: whole sequence resident in VMEM, re-pipelined timestep loop in-kernel.

    x_ref   : (T, B, 1)   time-major input
    w_ref   : (2H, 8H)    fused recurrent weight; rows 0:H multiply h1(t-1), rows H:2H multiply
                          h0(t); columns are gate blocks [i|f|g|o], each 2H wide = [layer1|layer0],
                          with 0.5 folded into i/f/o columns.
    w_in_ref: (1, 1, 8H)  layer-0 input weight row (zeros in layer-1 columns), scaled/permuted
    b_ref   : (1, 1, 8H)  combined biases (layer-1 cols: b_ih1+b_hh1, layer-0 cols: b_ih0+b_hh0)
    fcw_ref : (H, 1)      final linear weight (transposed); fcb_ref: (1, 1)
    out_ref : (B, 1)
    add_ref : (T, B, 8H)  VMEM scratch: per-timestep additive gate term (input term + biases)
    """
    T, B, _ = x_ref.shape
    H = HIDDEN
    H2 = 2 * H

    # Single fused recurrent weight; one dot per step -> stays latched in the MXU across the
    # fully-unrolled loop. 16 f32 vregs pinned; total live vregs stay well under the 64 budget.
    w = w_ref[...]                                   # (2H, 8H)
    b8 = b_ref[...]                                  # (1, 1, 8H)

    # Precompute the per-timestep additive gate term for ALL t (off the serial chain):
    #   layer-1 columns: b1 (time-invariant); layer-0 columns: x(t) * w_ih0 + b0.
    add_ref[...] = x_ref[...] * w_in_ref[...] + b8   # (T, B, 8H)

    def packed_cell(gates, c_pack):
        # gates: (B, 8H) pre-activations; blocks [i|f|g|o] each 2H wide = [layer1 | layer0].
        # i/f/o columns were pre-scaled by 0.5, so ONE tanh gives both sigmoid (via affine) and tanh.
        t = jnp.tanh(gates)                          # single EUP pass over the gate slab
        a = 0.5 * t + 0.5                            # = sigmoid(unscaled pre-activation) on i/f/o
        i = a[:, 0:H2]
        f = a[:, H2:2 * H2]
        g = t[:, 2 * H2:3 * H2]
        o = a[:, 3 * H2:4 * H2]
        c_new = f * c_pack + i * g                   # both layers' cells in one pass  (B, 2H)
        h_new = o * jnp.tanh(c_new)                  # single tanh for both layers     (B, 2H)
        return h_new, c_new

    # ---- prologue: layer-0 cell at t=0 (h0(-1)=c0(-1)=0 -> gates are just add[0]; no matmul) ----
    zeros_h = jnp.zeros((B, H), jnp.float32)
    h_pro, c_pro = packed_cell(add_ref[0], jnp.zeros((B, H2), jnp.float32))
    # Packed state order is [layer1 | layer0]; layer-1 state stays zero after the prologue.
    h_pack = jnp.concatenate([zeros_h, h_pro[:, H:]], axis=1)   # [h1(-1)=0 | h0(0)]
    c_pack = jnp.concatenate([zeros_h, c_pro[:, H:]], axis=1)

    # ---- steady state: one MXU matmul per timestep ----
    # Iteration s computes layer-1 at time s AND layer-0 at time s+1 (both depend only on the packed
    # carry and add[s+1]), so the two layers' nonlinearity chains overlap instead of serializing.
    def step(s, carry):
        h_pk, c_pk = carry
        mm = jnp.dot(h_pk, w, preferred_element_type=jnp.float32)   # (B, 8H)
        return packed_cell(mm + add_ref[s + 1], c_pk)

    h_pack, c_pack = lax.fori_loop(0, T - 1, step, (h_pack, c_pack), unroll=True)

    # ---- epilogue: final layer-1 cell at t=T-1 (layer-0 half of the update is discarded) ----
    mm = jnp.dot(h_pack, w, preferred_element_type=jnp.float32)
    h_fin, _ = packed_cell(mm + b8[0], c_pack)
    h1_last = h_fin[:, 0:H]

    # Linear head on the last hidden state of the top layer.
    out_ref[...] = (jnp.dot(h1_last, fcw_ref[...], preferred_element_type=jnp.float32)
                    + fcb_ref[...])


def _interleave_gates(l1_4h, l0_4h, H):
    """Map two (..., 4H) arrays in PyTorch gate order [i,f,g,o] into one (..., 8H) array laid out as
    blocks [i|f|g|o], each 2H wide = [layer1 | layer0], with 0.5 folded into i/f/o columns."""
    parts = []
    for gate, scale in enumerate(_GATE_SCALES):
        sl = slice(gate * H, (gate + 1) * H)
        parts.append(l1_4h[..., sl] * scale)
        parts.append(l0_4h[..., sl] * scale)
    return jnp.concatenate(parts, axis=-1)


def passengers_rnn_forward(x, params):
    """x: (B, T, 1) float32. Returns (B, 1) float32. Eval-mode forward (no dropout)."""
    B, T, _ = x.shape
    assert T >= 1, "need at least one timestep"
    H = HIDDEN

    # Pad the batch to a sublane multiple so state / gate tiles are sublane-aligned.
    Bp = max(_SUBLANES, ((B + _SUBLANES - 1) // _SUBLANES) * _SUBLANES)
    x_tm = jnp.transpose(x, (1, 0, 2)).astype(jnp.float32)   # (T, B, 1) time-major
    if Bp != B:
        x_tm = jnp.pad(x_tm, ((0, 0), (0, Bp - B), (0, 0)))

    # Fused recurrent weight: rows 0:H multiply h1(t-1), rows H:2H multiply h0(t).
    #   layer-1 gate columns <- [Whh1^T ; Wih1^T];  layer-0 gate columns <- [0 ; Whh0^T].
    z4 = jnp.zeros((H, 4 * H), jnp.float32)
    w_rows_h1 = _interleave_gates(params["w_hh_l1"].T.astype(jnp.float32), z4, H)              # (H, 8H)
    w_rows_h0 = _interleave_gates(params["w_ih_l1"].T.astype(jnp.float32),
                                  params["w_hh_l0"].T.astype(jnp.float32), H)                  # (H, 8H)
    w = jnp.concatenate([w_rows_h1, w_rows_h0], axis=0)                                        # (2H, 8H)

    z1 = jnp.zeros((4 * H,), jnp.float32)
    w_in = _interleave_gates(z1, params["w_ih_l0"][:, 0].astype(jnp.float32), H).reshape(1, 1, 8 * H)
    bias8 = _interleave_gates((params["b_ih_l1"] + params["b_hh_l1"]).astype(jnp.float32),
                              (params["b_ih_l0"] + params["b_hh_l0"]).astype(jnp.float32),
                              H).reshape(1, 1, 8 * H)

    fcw = params["fc_w"].T.astype(jnp.float32)     # (H, 1)
    fcb = params["fc_b"].reshape(1, 1).astype(jnp.float32)

    out = pl.pallas_call(
        _lstm_kernel,
        out_shape=jax.ShapeDtypeStruct((Bp, 1), jnp.float32),
        scratch_shapes=[pltpu.VMEM((T, Bp, 8 * H), jnp.float32)],
        # Whole problem is a few KB -> single VMEM-resident invocation (no grid), per the review.
        # TODO(synk): for long T chunk the time axis (pltpu.emit_pipeline) and cap the unroll; for
        #             Bp >= 16 on v7x add a 'parallel' batch grid axis to use the second TensorCore.
    )(x_tm, w, w_in, bias8, fcw, fcb)
    return out[:B]


def init_params(key, hidden=HIDDEN, input_size=INPUT_SIZE):
    """Deterministic init, matching PyTorch shapes: uniform(-1/sqrt(H), 1/sqrt(H))."""
    k = 1.0 / jnp.sqrt(jnp.float32(hidden))
    names_shapes = [
        ("w_ih_l0", (4 * hidden, input_size)),
        ("w_hh_l0", (4 * hidden, hidden)),
        ("b_ih_l0", (4 * hidden,)),
        ("b_hh_l0", (4 * hidden,)),
        ("w_ih_l1", (4 * hidden, hidden)),
        ("w_hh_l1", (4 * hidden, hidden)),
        ("b_ih_l1", (4 * hidden,)),
        ("b_hh_l1", (4 * hidden,)),
        ("fc_w", (1, hidden)),
        ("fc_b", (1,)),
    ]
    params = {}
    keys = jax.random.split(key, len(names_shapes))
    for sub, (name, shape) in zip(keys, names_shapes):
        params[name] = jax.random.uniform(sub, shape, jnp.float32, -k, k)
    return params


def reference_forward(x, params):
    """Pure-JAX reference of the same forward pass (for verification)."""
    B, T, _ = x.shape
    H = HIDDEN

    def cell(x_in, h, c, wih, whh, b_ih, b_hh):
        gates = x_in @ wih.T + b_ih + h @ whh.T + b_hh
        i = jax.nn.sigmoid(gates[:, 0:H])
        f = jax.nn.sigmoid(gates[:, H:2 * H])
        g = jnp.tanh(gates[:, 2 * H:3 * H])
        o = jax.nn.sigmoid(gates[:, 3 * H:4 * H])
        c_new = f * c + i * g
        return o * jnp.tanh(c_new), c_new

    h0 = c0 = h1 = c1 = jnp.zeros((B, H), jnp.float32)
    for t in range(T):
        x_t = x[:, t, :]
        h0, c0 = cell(x_t, h0, c0, params["w_ih_l0"], params["w_hh_l0"],
                      params["b_ih_l0"], params["b_hh_l0"])
        h1, c1 = cell(h0, h1, c1, params["w_ih_l1"], params["w_hh_l1"],
                      params["b_ih_l1"], params["b_hh_l1"])
    return h1 @ params["fc_w"].T + params["fc_b"]


if __name__ == "__main__":
    key = jax.random.PRNGKey(0)
    k_param, k_x = jax.random.split(key)

    B, T = 2, 8
    x = jax.random.normal(k_x, (B, T, INPUT_SIZE), jnp.float32)
    params = init_params(k_param)

    out = passengers_rnn_forward(x, params)
    out = jax.block_until_ready(out)

    ref = reference_forward(x, params)
    assert out.shape == (B, 1)
    assert jnp.allclose(out, ref, atol=1e-4, rtol=1e-4), (out, ref)
    print("KERNEL_OK")
</pallas_src>

<mosaic_0001>
module attributes {stable_mosaic.version = 11 : i64} {
  func.func @_lstm_kernel(%arg0: memref<8x8x1xf32, #tpu.memory_space<vmem>>, %arg1: memref<64x256xf32, #tpu.memory_space<vmem>>, %arg2: memref<1x1x256xf32, #tpu.memory_space<vmem>>, %arg3: memref<1x1x256xf32, #tpu.memory_space<vmem>>, %arg4: memref<32x1xf32, #tpu.memory_space<vmem>>, %arg5: memref<1x1xf32, #tpu.memory_space<vmem>>, %arg6: memref<8x1xf32, #tpu.memory_space<vmem>>, %arg7: memref<8x8x256xf32, #tpu.memory_space<vmem>>) attributes {dimension_semantics = [], scalar_prefetch = 0 : i64, scratch_operands = 1 : i64, tpu.core_type = #tpu.core_type<tc>} {
    %c0 = arith.constant 0 : index
    %c0_0 = arith.constant 0 : index
    %0 = vector.load %arg1[%c0, %c0_0] : memref<64x256xf32, #tpu.memory_space<vmem>>, vector<64x256xf32>
    %c0_1 = arith.constant 0 : index
    %c0_2 = arith.constant 0 : index
    %c0_3 = arith.constant 0 : index
    %1 = vector.load %arg3[%c0_1, %c0_2, %c0_3] : memref<1x1x256xf32, #tpu.memory_space<vmem>>, vector<1x1x256xf32>
    %c0_4 = arith.constant 0 : index
    %c0_5 = arith.constant 0 : index
    %c0_6 = arith.constant 0 : index
    %2 = vector.load %arg0[%c0_4, %c0_5, %c0_6] : memref<8x8x1xf32, #tpu.memory_space<vmem>>, vector<8x8x1xf32>
    %c0_7 = arith.constant 0 : index
    %c0_8 = arith.constant 0 : index
    %c0_9 = arith.constant 0 : index
    %3 = vector.load %arg2[%c0_7, %c0_8, %c0_9] : memref<1x1x256xf32, #tpu.memory_space<vmem>>, vector<1x1x256xf32>
    %4 = vector.broadcast %2 : vector<8x8x1xf32> to vector<8x8x256xf32>
    %5 = vector.broadcast %3 : vector<1x1x256xf32> to vector<8x8x256xf32>
    %6 = arith.mulf %4, %5 : vector<8x8x256xf32>
    %7 = vector.broadcast %1 : vector<1x1x256xf32> to vector<8x8x256xf32>
    %8 = arith.addf %6, %7 : vector<8x8x256xf32>
    %c0_10 = arith.constant 0 : index
    %c0_11 = arith.constant 0 : index
    %c0_12 = arith.constant 0 : index
    %9 = vector.load %arg7[%c0_10, %c0_11, %c0_12] : memref<8x8x256xf32, #tpu.memory_space<vmem>>, vector<8x8x256xf32>
    tpu.vector_store %arg7[%c0_10, %c0_11, %c0_12], %8 {strides = array<i32>} : memref<8x8x256xf32, #tpu.memory_space<vmem>>, vector<8x8x256xf32>,
    %cst = arith.constant 0.000000e+00 : f32
    %10 = vector.broadcast %cst : f32 to vector<8x32xf32>
    %c0_13 = arith.constant 0 : index
    %c0_14 = arith.constant 0 : index
    %c0_15 = arith.constant 0 : index
    %11 = vector.load %arg7[%c0_13, %c0_14, %c0_15] : memref<8x8x256xf32, #tpu.memory_space<vmem>>, vector<1x8x256xf32>
    %12 = vector.shape_cast %11 : vector<1x8x256xf32> to vector<8x256xf32>
    %cst_16 = arith.constant 0.000000e+00 : f32
    %13 = vector.broadcast %cst_16 : f32 to vector<8x64xf32>
    %14 = math.tanh %12 : vector<8x256xf32>
    %cst_17 = arith.constant 5.000000e-01 : f32
    %15 = vector.broadcast %cst_17 : f32 to vector<8x256xf32>
    %16 = arith.mulf %15, %14 : vector<8x256xf32>
    %cst_18 = arith.constant 5.000000e-01 : f32
    %17 = vector.broadcast %cst_18 : f32 to vector<8x256xf32>
    %18 = arith.addf %16, %17 : vector<8x256xf32>
    %19 = vector.extract_strided_slice %18 {offsets = [0, 0], sizes = [8, 64], strides = [1, 1]} : vector<8x256xf32> to vector<8x64xf32>
    %20 = vector.extract_strided_slice %18 {offsets = [0, 64], sizes = [8, 64], strides = [1, 1]} : vector<8x256xf32> to vector<8x64xf32>
    %21 = vector.extract_strided_slice %14 {offsets = [0, 128], sizes = [8, 64], strides = [1, 1]} : vector<8x256xf32> to vector<8x64xf32>
    %22 = vector.extract_strided_slice %18 {offsets = [0, 192], sizes = [8, 64], strides = [1, 1]} : vector<8x256xf32> to vector<8x64xf32>
    %23 = arith.mulf %20, %13 : vector<8x64xf32>
    %24 = arith.mulf %19, %21 : vector<8x64xf32>
    %25 = arith.addf %23, %24 : vector<8x64xf32>
    %26 = math.tanh %25 : vector<8x64xf32>
    %27 = arith.mulf %22, %26 : vector<8x64xf32>
    %28 = vector.extract_strided_slice %27 {offsets = [0, 32], sizes = [8, 32], strides = [1, 1]} : vector<8x64xf32> to vector<8x32xf32>
    %29 = tpu.concatenate %10, %28 in 1 : vector<8x32xf32>, vector<8x32xf32> -> vector<8x64xf32>
    %30 = vector.extract_strided_slice %25 {offsets = [0, 32], sizes = [8, 32], strides = [1, 1]} : vector<8x64xf32> to vector<8x32xf32>
    %31 = tpu.concatenate %10, %30 in 1 : vector<8x32xf32>, vector<8x32xf32> -> vector<8x64xf32>
    %c0_i32 = arith.constant 0 : i32
    %cst_19 = arith.constant dense<0.000000e+00> : vector<8x256xf32>
    %32 = tpu.matmul %29, %0, %cst_19 {dimension_numbers = #tpu.dot_dimension_numbers<[1], [0], [0], [1], [0, 0, 1, 1], [], []>} : vector<8x64xf32>, vector<64x256xf32>, vector<8x256xf32> -> vector<8x256xf32>
    %c1_i32 = arith.constant 1 : i32
    %33 = arith.addi %c0_i32, %c1_i32 : i32
    %34 = arith.index_cast %33 : i32 to index
    %c0_20 = arith.constant 0 : index
    %c0_21 = arith.constant 0 : index
    %35 = vector.load %arg7[%34, %c0_20, %c0_21] : memref<8x8x256xf32, #tpu.memory_space<vmem>>, vector<1x8x256xf32>
    %36 = vector.shape_cast %35 : vector<1x8x256xf32> to vector<8x256xf32>
    %37 = arith.addf %32, %36 : vector<8x256xf32>
    %38 = math.tanh %37 : vector<8x256xf32>
    %cst_22 = arith.constant 5.000000e-01 : f32
    %39 = vector.broadcast %cst_22 : f32 to vector<8x256xf32>
    %40 = arith.mulf %39, %38 : vector<8x256xf32>
    %cst_23 = arith.constant 5.000000e-01 : f32
    %41 = vector.broadcast %cst_23 : f32 to vector<8x256xf32>
    %42 = arith.addf %40, %41 : vector<8x256xf32>
    %43 = vector.extract_strided_slice %42 {offsets = [0, 0], sizes = [8, 64], strides = [1, 1]} : vector<8x256xf32> to vector<8x64xf32>
    %44 = vector.extract_strided_slice %42 {offsets = [0, 64], sizes = [8, 64], strides = [1, 1]} : vector<8x256xf32> to vector<8x64xf32>
    %45 = vector.extract_strided_slice %38 {offsets = [0, 128], sizes = [8, 64], strides = [1, 1]} : vector<8x256xf32> to vector<8x64xf32>
    %46 = vector.extract_strided_slice %42 {offsets = [0, 192], sizes = [8, 64], strides = [1, 1]} : vector<8x256xf32> to vector<8x64xf32>
    %47 = arith.mulf %44, %31 : vector<8x64xf32>
    %48 = arith.mulf %43, %45 : vector<8x64xf32>
    %49 = arith.addf %47, %48 : vector<8x64xf32>
    %50 = math.tanh %49 : vector<8x64xf32>
    %51 = arith.mulf %46, %50 : vector<8x64xf32>
    %c1_i32_24 = arith.constant 1 : i32
    %cst_25 = arith.constant dense<0.000000e+00> : vector<8x256xf32>
    %52 = tpu.matmul %51, %0, %cst_25 {dimension_numbers = #tpu.dot_dimension_numbers<[1], [0], [0], [1], [0, 0, 1, 1], [], []>} : vector<8x64xf32>, vector<64x256xf32>, vector<8x256xf32> -> vector<8x256xf32>
    %c1_i32_26 = arith.constant 1 : i32
    %53 = arith.addi %c1_i32_24, %c1_i32_26 : i32
    %54 = arith.index_cast %53 : i32 to index
    %c0_27 = arith.constant 0 : index
    %c0_28 = arith.constant 0 : index
    %55 = vector.load %arg7[%54, %c0_27, %c0_28] : memref<8x8x256xf32, #tpu.memory_space<vmem>>, vector<1x8x256xf32>
    %56 = vector.shape_cast %55 : vector<1x8x256xf32> to vector<8x256xf32>
    %57 = arith.addf %52, %56 : vector<8x256xf32>
    %58 = math.tanh %57 : vector<8x256xf32>
    %cst_29 = arith.constant 5.000000e-01 : f32
    %59 = vector.broadcast %cst_29 : f32 to vector<8x256xf32>
    %60 = arith.mulf %59, %58 : vector<8x256xf32>
    %cst_30 = arith.constant 5.000000e-01 : f32
    %61 = vector.broadcast %cst_30 : f32 to vector<8x256xf32>
    %62 = arith.addf %60, %61 : vector<8x256xf32>
    %63 = vector.extract_strided_slice %62 {offsets = [0, 0], sizes = [8, 64], strides = [1, 1]} : vector<8x256xf32> to vector<8x64xf32>
    %64 = vector.extract_strided_slice %62 {offsets = [0, 64], sizes = [8, 64], strides = [1, 1]} : vector<8x256xf32> to vector<8x64xf32>
    %65 = vector.extract_strided_slice %58 {offsets = [0, 128], sizes = [8, 64], strides = [1, 1]} : vector<8x256xf32> to vector<8x64xf32>
    %66 = vector.extract_strided_slice %62 {offsets = [0, 192], sizes = [8, 64], strides = [1, 1]} : vector<8x256xf32> to vector<8x64xf32>
    %67 = arith.mulf %64, %49 : vector<8x64xf32>
    %68 = arith.mulf %63, %65 : vector<8x64xf32>
    %69 = arith.addf %67, %68 : vector<8x64xf32>
    %70 = math.tanh %69 : vector<8x64xf32>
    %71 = arith.mulf %66, %70 : vector<8x64xf32>
    %c2_i32 = arith.constant 2 : i32
    %cst_31 = arith.constant dense<0.000000e+00> : vector<8x256xf32>
    %72 = tpu.matmul %71, %0, %cst_31 {dimension_numbers = #tpu.dot_dimension_numbers<[1], [0], [0], [1], [0, 0, 1, 1], [], []>} : vector<8x64xf32>, vector<64x256xf32>, vector<8x256xf32> -> vector<8x256xf32>
    %c1_i32_32 = arith.constant 1 : i32
    %73 = arith.addi %c2_i32, %c1_i32_32 : i32
    %74 = arith.index_cast %73 : i32 to index
    %c0_33 = arith.constant 0 : index
    %c0_34 = arith.constant 0 : index
    %75 = vector.load %arg7[%74, %c0_33, %c0_34] : memref<8x8x256xf32, #tpu.memory_space<vmem>>, vector<1x8x256xf32>
    %76 = vector.shape_cast %75 : vector<1x8x256xf32> to vector<8x256xf32>
    %77 = arith.addf %72, %76 : vector<8x256xf32>
    %78 = math.tanh %77 : vector<8x256xf32>
    %cst_35 = arith.constant 5.000000e-01 : f32
    %79 = vector.broadcast %cst_35 : f32 to vector<8x256xf32>
    %80 = arith.mulf %79, %78 : vector<8x256xf32>
    %cst_36 = arith.constant 5.000000e-01 : f32
    %81 = vector.broadcast %cst_36 : f32 to vector<8x256xf32>
    %82 = arith.addf %80, %81 : vector<8x256xf32>
    %83 = vector.extract_strided_slice %82 {offsets = [0, 0], sizes = [8, 64], strides = [1, 1]} : vector<8x256xf32> to vector<8x64xf32>
    %84 = vector.extract_strided_slice %82 {offsets = [0, 64], sizes = [8, 64], strides = [1, 1]} : vector<8x256xf32> to vector<8x64xf32>
    %85 = vector.extract_strided_slice %78 {offsets = [0, 128], sizes = [8, 64], strides = [1, 1]} : vector<8x256xf32> to vector<8x64xf32>
    %86 = vector.extract_strided_slice %82 {offsets = [0, 192], sizes = [8, 64], strides = [1, 1]} : vector<8x256xf32> to vector<8x64xf32>
    %87 = arith.mulf %84, %69 : vector<8x64xf32>
    %88 = arith.mulf %83, %85 : vector<8x64xf32>
    %89 = arith.addf %87, %88 : vector<8x64xf32>
    %90 = math.tanh %89 : vector<8x64xf32>
    %91 = arith.mulf %86, %90 : vector<8x64xf32>
    %c3_i32 = arith.constant 3 : i32
    %cst_37 = arith.constant dense<0.000000e+00> : vector<8x256xf32>
    %92 = tpu.matmul %91, %0, %cst_37 {dimension_numbers = #tpu.dot_dimension_numbers<[1], [0], [0], [1], [0, 0, 1, 1], [], []>} : vector<8x64xf32>, vector<64x256xf32>, vector<8x256xf32> -> vector<8x256xf32>
    %c1_i32_38 = arith.constant 1 : i32
    %93 = arith.addi %c3_i32, %c1_i32_38 : i32
    %94 = arith.index_cast %93 : i32 to index
    %c0_39 = arith.constant 0 : index
    %c0_40 = arith.constant 0 : index
    %95 = vector.load %arg7[%94, %c0_39, %c0_40] : memref<8x8x256xf32, #tpu.memory_space<vmem>>, vector<1x8x256xf32>
    %96 = vector.shape_cast %95 : vector<1x8x256xf32> to vector<8x256xf32>
    %97 = arith.addf %92, %96 : vector<8x256xf32>
    %98 = math.tanh %97 : vector<8x256xf32>
    %cst_41 = arith.constant 5.000000e-01 : f32
    %99 = vector.broadcast %cst_41 : f32 to vector<8x256xf32>
    %100 = arith.mulf %99, %98 : vector<8x256xf32>
    %cst_42 = arith.constant 5.000000e-01 : f32
    %101 = vector.broadcast %cst_42 : f32 to vector<8x256xf32>
    %102 = arith.addf %100, %101 : vector<8x256xf32>
    %103 = vector.extract_strided_slice %102 {offsets = [0, 0], sizes = [8, 64], strides = [1, 1]} : vector<8x256xf32> to vector<8x64xf32>
    %104 = vector.extract_strided_slice %102 {offsets = [0, 64], sizes = [8, 64], strides = [1, 1]} : vector<8x256xf32> to vector<8x64xf32>
    %105 = vector.extract_strided_slice %98 {offsets = [0, 128], sizes = [8, 64], strides = [1, 1]} : vector<8x256xf32> to vector<8x64xf32>
    %106 = vector.extract_strided_slice %102 {offsets = [0, 192], sizes = [8, 64], strides = [1, 1]} : vector<8x256xf32> to vector<8x64xf32>
    %107 = arith.mulf %104, %89 : vector<8x64xf32>
    %108 = arith.mulf %103, %105 : vector<8x64xf32>
    %109 = arith.addf %107, %108 : vector<8x64xf32>
    %110 = math.tanh %109 : vector<8x64xf32>
    %111 = arith.mulf %106, %110 : vector<8x64xf32>
    %c4_i32 = arith.constant 4 : i32
    %cst_43 = arith.constant dense<0.000000e+00> : vector<8x256xf32>
    %112 = tpu.matmul %111, %0, %cst_43 {dimension_numbers = #tpu.dot_dimension_numbers<[1], [0], [0], [1], [0, 0, 1, 1], [], []>} : vector<8x64xf32>, vector<64x256xf32>, vector<8x256xf32> -> vector<8x256xf32>
    %c1_i32_44 = arith.constant 1 : i32
    %113 = arith.addi %c4_i32, %c1_i32_44 : i32
    %114 = arith.index_cast %113 : i32 to index
    %c0_45 = arith.constant 0 : index
    %c0_46 = arith.constant 0 : index
    %115 = vector.load %arg7[%114, %c0_45, %c0_46] : memref<8x8x256xf32, #tpu.memory_space<vmem>>, vector<1x8x256xf32>
    %116 = vector.shape_cast %115 : vector<1x8x256xf32> to vector<8x256xf32>
    %117 = arith.addf %112, %116 : vector<8x256xf32>
    %118 = math.tanh %117 : vector<8x256xf32>
    %cst_47 = arith.constant 5.000000e-01 : f32
    %119 = vector.broadcast %cst_47 : f32 to vector<8x256xf32>
    %120 = arith.mulf %119, %118 : vector<8x256xf32>
    %cst_48 = arith.constant 5.000000e-01 : f32
    %121 = vector.broadcast %cst_48 : f32 to vector<8x256xf32>
    %122 = arith.addf %120, %121 : vector<8x256xf32>
    %123 = vector.extract_strided_slice %122 {offsets = [0, 0], sizes = [8, 64], strides = [1, 1]} : vector<8x256xf32> to vector<8x64xf32>
    %124 = vector.extract_strided_slice %122 {offsets = [0, 64], sizes = [8, 64], strides = [1, 1]} : vector<8x256xf32> to vector<8x64xf32>
    %125 = vector.extract_strided_slice %118 {offsets = [0, 128], sizes = [8, 64], strides = [1, 1]} : vector<8x256xf32> to vector<8x64xf32>
    %126 = vector.extract_strided_slice %122 {offsets = [0, 192], sizes = [8, 64], strides = [1, 1]} : vector<8x256xf32> to vector<8x64xf32>
    %127 = arith.mulf %124, %109 : vector<8x64xf32>
    %128 = arith.mulf %123, %125 : vector<8x64xf32>
    %129 = arith.addf %127, %128 : vector<8x64xf32>
    %130 = math.tanh %129 : vector<8x64xf32>
    %131 = arith.mulf %126, %130 : vector<8x64xf32>
    %c5_i32 = arith.constant 5 : i32
    %cst_49 = arith.constant dense<0.000000e+00> : vector<8x256xf32>
    %132 = tpu.matmul %131, %0, %cst_49 {dimension_numbers = #tpu.dot_dimension_numbers<[1], [0], [0], [1], [0, 0, 1, 1], [], []>} : vector<8x64xf32>, vector<64x256xf32>, vector<8x256xf32> -> vector<8x256xf32>
    %c1_i32_50 = arith.constant 1 : i32
    %133 = arith.addi %c5_i32, %c1_i32_50 : i32
    %134 = arith.index_cast %133 : i32 to index
    %c0_51 = arith.constant 0 : index
    %c0_52 = arith.constant 0 : index
    %135 = vector.load %arg7[%134, %c0_51, %c0_52] : memref<8x8x256xf32, #tpu.memory_space<vmem>>, vector<1x8x256xf32>
    %136 = vector.shape_cast %135 : vector<1x8x256xf32> to vector<8x256xf32>
    %137 = arith.addf %132, %136 : vector<8x256xf32>
    %138 = math.tanh %137 : vector<8x256xf32>
    %cst_53 = arith.constant 5.000000e-01 : f32
    %139 = vector.broadcast %cst_53 : f32 to vector<8x256xf32>
    %140 = arith.mulf %139, %138 : vector<8x256xf32>
    %cst_54 = arith.constant 5.000000e-01 : f32
    %141 = vector.broadcast %cst_54 : f32 to vector<8x256xf32>
    %142 = arith.addf %140, %141 : vector<8x256xf32>
    %143 = vector.extract_strided_slice %142 {offsets = [0, 0], sizes = [8, 64], strides = [1, 1]} : vector<8x256xf32> to vector<8x64xf32>
    %144 = vector.extract_strided_slice %142 {offsets = [0, 64], sizes = [8, 64], strides = [1, 1]} : vector<8x256xf32> to vector<8x64xf32>
    %145 = vector.extract_strided_slice %138 {offsets = [0, 128], sizes = [8, 64], strides = [1, 1]} : vector<8x256xf32> to vector<8x64xf32>
    %146 = vector.extract_strided_slice %142 {offsets = [0, 192], sizes = [8, 64], strides = [1, 1]} : vector<8x256xf32> to vector<8x64xf32>
    %147 = arith.mulf %144, %129 : vector<8x64xf32>
    %148 = arith.mulf %143, %145 : vector<8x64xf32>
    %149 = arith.addf %147, %148 : vector<8x64xf32>
    %150 = math.tanh %149 : vector<8x64xf32>
    %151 = arith.mulf %146, %150 : vector<8x64xf32>
    %c6_i32 = arith.constant 6 : i32
    %cst_55 = arith.constant dense<0.000000e+00> : vector<8x256xf32>
    %152 = tpu.matmul %151, %0, %cst_55 {dimension_numbers = #tpu.dot_dimension_numbers<[1], [0], [0], [1], [0, 0, 1, 1], [], []>} : vector<8x64xf32>, vector<64x256xf32>, vector<8x256xf32> -> vector<8x256xf32>
    %c1_i32_56 = arith.constant 1 : i32
    %153 = arith.addi %c6_i32, %c1_i32_56 : i32
    %154 = arith.index_cast %153 : i32 to index
    %c0_57 = arith.constant 0 : index
    %c0_58 = arith.constant 0 : index
    %155 = vector.load %arg7[%154, %c0_57, %c0_58] : memref<8x8x256xf32, #tpu.memory_space<vmem>>, vector<1x8x256xf32>
    %156 = vector.shape_cast %155 : vector<1x8x256xf32> to vector<8x256xf32>
    %157 = arith.addf %152, %156 : vector<8x256xf32>
    %158 = math.tanh %157 : vector<8x256xf32>
    %cst_59 = arith.constant 5.000000e-01 : f32
    %159 = vector.broadcast %cst_59 : f32 to vector<8x256xf32>
    %160 = arith.mulf %159, %158 : vector<8x256xf32>
    %cst_60 = arith.constant 5.000000e-01 : f32
    %161 = vector.broadcast %cst_60 : f32 to vector<8x256xf32>
    %162 = arith.addf %160, %161 : vector<8x256xf32>
    %163 = vector.extract_strided_slice %162 {offsets = [0, 0], sizes = [8, 64], strides = [1, 1]} : vector<8x256xf32> to vector<8x64xf32>
    %164 = vector.extract_strided_slice %162 {offsets = [0, 64], sizes = [8, 64], strides = [1, 1]} : vector<8x256xf32> to vector<8x64xf32>
    %165 = vector.extract_strided_slice %158 {offsets = [0, 128], sizes = [8, 64], strides = [1, 1]} : vector<8x256xf32> to vector<8x64xf32>
    %166 = vector.extract_strided_slice %162 {offsets = [0, 192], sizes = [8, 64], strides = [1, 1]} : vector<8x256xf32> to vector<8x64xf32>
    %167 = arith.mulf %164, %149 : vector<8x64xf32>
    %168 = arith.mulf %163, %165 : vector<8x64xf32>
    %169 = arith.addf %167, %168 : vector<8x64xf32>
    %170 = math.tanh %169 : vector<8x64xf32>
    %171 = arith.mulf %166, %170 : vector<8x64xf32>
    %c7_i32 = arith.constant 7 : i32
    %cst_61 = arith.constant dense<0.000000e+00> : vector<8x256xf32>
    %172 = tpu.matmul %171, %0, %cst_61 {dimension_numbers = #tpu.dot_dimension_numbers<[1], [0], [0], [1], [0, 0, 1, 1], [], []>} : vector<8x64xf32>, vector<64x256xf32>, vector<8x256xf32> -> vector<8x256xf32>
    %173 = vector.shape_cast %1 : vector<1x1x256xf32> to vector<1x256xf32>
    %174 = vector.broadcast %173 : vector<1x256xf32> to vector<8x256xf32>
    %175 = arith.addf %172, %174 : vector<8x256xf32>
    %176 = math.tanh %175 : vector<8x256xf32>
    %cst_62 = arith.constant 5.000000e-01 : f32
    %177 = vector.broadcast %cst_62 : f32 to vector<8x256xf32>
    %178 = arith.mulf %177, %176 : vector<8x256xf32>
    %cst_63 = arith.constant 5.000000e-01 : f32
    %179 = vector.broadcast %cst_63 : f32 to vector<8x256xf32>
    %180 = arith.addf %178, %179 : vector<8x256xf32>
    %181 = vector.extract_strided_slice %180 {offsets = [0, 0], sizes = [8, 64], strides = [1, 1]} : vector<8x256xf32> to vector<8x64xf32>
    %182 = vector.extract_strided_slice %180 {offsets = [0, 64], sizes = [8, 64], strides = [1, 1]} : vector<8x256xf32> to vector<8x64xf32>
    %183 = vector.extract_strided_slice %176 {offsets = [0, 128], sizes = [8, 64], strides = [1, 1]} : vector<8x256xf32> to vector<8x64xf32>
    %184 = vector.extract_strided_slice %180 {offsets = [0, 192], sizes = [8, 64], strides = [1, 1]} : vector<8x256xf32> to vector<8x64xf32>
    %185 = arith.mulf %182, %169 : vector<8x64xf32>
    %186 = arith.mulf %181, %183 : vector<8x64xf32>
    %187 = arith.addf %185, %186 : vector<8x64xf32>
    %188 = math.tanh %187 : vector<8x64xf32>
    %189 = arith.mulf %184, %188 : vector<8x64xf32>
    %190 = vector.extract_strided_slice %189 {offsets = [0, 0], sizes = [8, 32], strides = [1, 1]} : vector<8x64xf32> to vector<8x32xf32>
    %c0_64 = arith.constant 0 : index
    %c0_65 = arith.constant 0 : index
    %191 = vector.load %arg4[%c0_64, %c0_65] : memref<32x1xf32, #tpu.memory_space<vmem>>, vector<32x1xf32>
    %cst_66 = arith.constant dense<0.000000e+00> : vector<8x1xf32>
    %192 = tpu.matmul %190, %191, %cst_66 {dimension_numbers = #tpu.dot_dimension_numbers<[1], [0], [0], [1], [0, 0, 1, 1], [], []>} : vector<8x32xf32>, vector<32x1xf32>, vector<8x1xf32> -> vector<8x1xf32>
    %c0_67 = arith.constant 0 : index
    %c0_68 = arith.constant 0 : index
    %193 = vector.load %arg5[%c0_67, %c0_68] : memref<1x1xf32, #tpu.memory_space<vmem>>, vector<1x1xf32>
    %194 = vector.broadcast %193 : vector<1x1xf32> to vector<8x1xf32>
    %195 = arith.addf %192, %194 : vector<8x1xf32>
    %c0_69 = arith.constant 0 : index
    %c0_70 = arith.constant 0 : index
    %196 = vector.load %arg6[%c0_69, %c0_70] : memref<8x1xf32, #tpu.memory_space<vmem>>, vector<8x1xf32>
    tpu.vector_store %arg6[%c0_69, %c0_70], %195 {strides = array<i32>} : memref<8x1xf32, #tpu.memory_space<vmem>>, vector<8x1xf32>,
    return
  }
}

</mosaic_0001>

<llo_original>
// kernel: tpu_custom_call.1
$region0: #{tpu_custom_call.1}
  #allocation0 [shape = 'u32[]', space=smem, size = 0x4, offset = 0x4, fixed_abs, tag = 'smem constant byte address 0x4 - core index']
  #allocation1 [shape = 'u32[72,128]{1,0:T(1,128)}', space=vmem, size = 0x9000, scoped, tag = 'internal scratch']
  #allocation2 [shape = 'f32[8,8,256]{2,1,0:T(8,128)}', space=vmem, size = 0x10000, scoped, tag = 'scratch operand']
  #allocation3 [shape = 'f32[1,1]{1,0:T(1,128)S(1)}', space=vmem, size = 0x200, scoped, tag = 'scoped memory for tpu_custom_call.1']
  %s0 = inlined_call_operand.vmem [shape: f32[8,8,1], index: 0, kind: input, shape index: {}]
  %s1 = inlined_call_operand.hbm [shape: f32[64,256], index: 1, kind: input, shape index: {}]
  %s2 = inlined_call_operand.vmem [shape: f32[1,1,256], index: 2, kind: input, shape index: {}]
  %s3 = inlined_call_operand.vmem [shape: f32[1,1,256], index: 3, kind: input, shape index: {}]
  %s4 = inlined_call_operand.vmem [shape: f32[32,1], index: 4, kind: input, shape index: {}]
  %s5 = inlined_call_operand.<no memory space> [shape: f32[1,1], index: 5, kind: input, shape index: {}]
  %s6 = inlined_call_operand.vmem [shape: f32[8,1], index: 6, kind: output, shape index: {}]
  %s7 = sld [smem:[#allocation0]]
  $region38: #{tpu_custom_call.1} parent=0
    _
  %s9 = ssub.s32 1, %s7
  %s10 = scalar_select 0, %s9, %s7
  %v11 = vstv %s5
  %12 = vst [vmem:[#allocation3] sm:$0x1] %v11
  $region1: #{tpu_custom_call.1} parent=0
    #allocation4 [shape = 'u8[65536]{0}', space=vmem, size = 0x10000, scoped, tag = 'input window, operand 1, single buffered']
    #allocation5 [shape = 's32[1]{0}', space=sflag, size = 0x4, scoped, tag = 'scoped memory for tpu_custom_call.1']
    %13 = vsyncpa [#allocation5], 0
    // Predicated region
    $region2: #{tpu_custom_call.1} parent=1 // pred_check
      _
    $region3: #{tpu_custom_call.1} parent=1 // pred_check_branch
      %15 = sbr.rel (0) target = $region5
    $region4: #{tpu_custom_call.1} parent=1 // pred_region
      _
    $region5: #{tpu_custom_call.1} parent=1 // pred_fallthru
      _
    // Predicated region
    $region6: #{tpu_custom_call.1} parent=1 // pred_check
      _
    $region7: #{tpu_custom_call.1} parent=1 // pred_check_branch
      %17 = sbr.rel (0) target = $region9
    $region8: #{tpu_custom_call.1} parent=1 // pred_region
      %19 = vsyncadd [#allocation5], 0
      %s20 = sshll.u32 %s1, 4
      %s21 = int_to_ptr.hbm [resolvable:$true] %s20
      %s22 = sshll.u32 [#allocation4], 4
      %s23 = int_to_ptr.vmem [resolvable:$true] %s22
      %28 = dma.hbm_to_vmem [thread:$0]  %s21, 2048, %s23, [#allocation5], 256, 256, 16
    $region9: #{tpu_custom_call.1} parent=1 // pred_fallthru
      _
    // Predicated region
    $region10: #{tpu_custom_call.1} parent=1 // pred_check
      _
    $region11: #{tpu_custom_call.1} parent=1 // pred_check_branch
      %30 = sbr.rel (0) target = $region13
    $region12: #{tpu_custom_call.1} parent=1 // pred_region
      _
    $region13: #{tpu_custom_call.1} parent=1 // pred_fallthru
      _
    // Predicated region
    $region14: #{tpu_custom_call.1} parent=1 // pred_check
      _
    $region15: #{tpu_custom_call.1} parent=1 // pred_check_branch
      %32 = sbr.rel (0) target = $region17
    $region16: #{tpu_custom_call.1} parent=1 // pred_region
      _
    $region17: #{tpu_custom_call.1} parent=1 // pred_fallthru
      _
    // Predicated region
    $region18: #{tpu_custom_call.1} parent=1 // pred_check
      _
    $region19: #{tpu_custom_call.1} parent=1 // pred_check_branch
      %34 = sbr.rel (0) target = $region21
    $region20: #{tpu_custom_call.1} parent=1 // pred_region
      _
    $region21: #{tpu_custom_call.1} parent=1 // pred_fallthru
      _
    // Predicated region
    $region22: #{tpu_custom_call.1} parent=1 // pred_check
      _
    $region23: #{tpu_custom_call.1} parent=1 // pred_check_branch
      %36 = sbr.rel (0) target = $region25
    $region24: #{tpu_custom_call.1} parent=1 // pred_region
      _
    $region25: #{tpu_custom_call.1} parent=1 // pred_fallthru
      _
    // Predicated region
    $region26: #{tpu_custom_call.1} parent=1 // pred_check
      _
    $region27: #{tpu_custom_call.1} parent=1 // pred_check_branch
      %38 = sbr.rel (0) target = $region29
    $region28: #{tpu_custom_call.1} parent=1 // pred_region
      %40 = dma.done [#allocation5], 2048
    $region29: #{tpu_custom_call.1} parent=1 // pred_fallthru
      _
    %v41 = vld [vmem:[#allocation4] sm:$0xff]
    %v42 = vld [vmem:[#allocation4 + $0x8] sm:$0xff]
    %v43 = vld [vmem:[#allocation4 + $0x10] sm:$0xff]
    %v44 = vld [vmem:[#allocation4 + $0x18] sm:$0xff]
    %v45 = vld [vmem:[#allocation4 + $0x20] sm:$0xff]
    %v46 = vld [vmem:[#allocation4 + $0x28] sm:$0xff]
    %v47 = vld [vmem:[#allocation4 + $0x30] sm:$0xff]
    %v48 = vld [vmem:[#allocation4 + $0x38] sm:$0xff]
    %v49 = vld [vmem:[#allocation4 + $0x40] sm:$0xff]
    %v50 = vld [vmem:[#allocation4 + $0x48] sm:$0xff]
    %v51 = vld [vmem:[#allocation4 + $0x50] sm:$0xff]
    %v52 = vld [vmem:[#allocation4 + $0x58] sm:$0xff]
    %v53 = vld [vmem:[#allocation4 + $0x60] sm:$0xff]
    %v54 = vld [vmem:[#allocation4 + $0x68] sm:$0xff]
    %v55 = vld [vmem:[#allocation4 + $0x70] sm:$0xff]
    %v56 = vld [vmem:[#allocation4 + $0x78] sm:$0xff]
    %v57 = vld [vmem:[%s3] sm:$0x3]
    %v58 = vld [vmem:[%s0] sm:$0xff]
    %v59 = vld [vmem:[%s0 + $0x8] sm:$0xff]
    %v60 = vld [vmem:[%s0 + $0x10] sm:$0xff]
    %v61 = vld [vmem:[%s0 + $0x18] sm:$0xff]
    %v62 = vld [vmem:[%s0 + $0x20] sm:$0xff]
    %v63 = vld [vmem:[%s0 + $0x28] sm:$0xff]
    %v64 = vld [vmem:[%s0 + $0x30] sm:$0xff]
    %v65 = vld [vmem:[%s0 + $0x38] sm:$0xff]
    %v66 = vld [vmem:[%s2] sm:$0x3]
    %68 = vset.pattern.permute.xlu0 0
    %69 = vperm.xlu0 %68, %v58
    %v70 = vpop.permute.xlu0 %69
    %73 = vset.pattern.permute.xlu0 0
    %74 = vperm.xlu0 %73, %v59
    %v75 = vpop.permute.xlu0 %74
    %78 = vset.pattern.permute.xlu0 0
    %79 = vperm.xlu0 %78, %v60
    %v80 = vpop.permute.xlu0 %79
    %83 = vset.pattern.permute.xlu0 0
    %84 = vperm.xlu0 %83, %v61
    %v85 = vpop.permute.xlu0 %84
    %88 = vset.pattern.permute.xlu0 0
    %89 = vperm.xlu0 %88, %v62
    %v90 = vpop.permute.xlu0 %89
    %93 = vset.pattern.permute.xlu0 0
    %94 = vperm.xlu0 %93, %v63
    %v95 = vpop.permute.xlu0 %94
    %98 = vset.pattern.permute.xlu0 0
    %99 = vperm.xlu0 %98, %v64
    %v100 = vpop.permute.xlu0 %99
    %103 = vset.pattern.permute.xlu0 0
    %104 = vperm.xlu0 %103, %v65
    %v105 = vpop.permute.xlu0 %104
    %v108 = vperm.slane %v66, 0
    %v109 = vperm.slane %v66, 1
    %v112 = vmul.f32 %v70, %v108
    %v113 = vmul.f32 %v70, %v109
    %v114 = vmul.f32 %v75, %v108
    %v115 = vmul.f32 %v75, %v109
    %v116 = vmul.f32 %v80, %v108
    %v117 = vmul.f32 %v80, %v109
    %v118 = vmul.f32 %v85, %v108
    %v119 = vmul.f32 %v85, %v109
    %v120 = vmul.f32 %v90, %v108
    %v121 = vmul.f32 %v90, %v109
    %v122 = vmul.f32 %v95, %v108
    %v123 = vmul.f32 %v95, %v109
    %v124 = vmul.f32 %v100, %v108
    %v125 = vmul.f32 %v100, %v109
    %v126 = vmul.f32 %v105, %v108
    %v127 = vmul.f32 %v105, %v109
    %v129 = vperm.slane %v57, 0
    %v130 = vperm.slane %v57, 1
    %v133 = vadd.f32 %v112, %v129
    %v134 = vadd.f32 %v113, %v130
    %v135 = vadd.f32 %v114, %v129
    %v136 = vadd.f32 %v115, %v130
    %v137 = vadd.f32 %v116, %v129
    %v138 = vadd.f32 %v117, %v130
    %v139 = vadd.f32 %v118, %v129
    %v140 = vadd.f32 %v119, %v130
    %v141 = vadd.f32 %v120, %v129
    %v142 = vadd.f32 %v121, %v130
    %v143 = vadd.f32 %v122, %v129
    %v144 = vadd.f32 %v123, %v130
    %v145 = vadd.f32 %v124, %v129
    %v146 = vadd.f32 %v125, %v130
    %v147 = vadd.f32 %v126, %v129
    %v148 = vadd.f32 %v127, %v130
    %149 = vst [vmem:[#allocation2] sm:$0xff] %v133
    %150 = vst [vmem:[#allocation2 + $0x8] sm:$0xff] %v134
    %151 = vst [vmem:[#allocation2 + $0x10] sm:$0xff] %v135
    %152 = vst [vmem:[#allocation2 + $0x18] sm:$0xff] %v136
    %153 = vst [vmem:[#allocation2 + $0x20] sm:$0xff] %v137
    %154 = vst [vmem:[#allocation2 + $0x28] sm:$0xff] %v138
    %155 = vst [vmem:[#allocation2 + $0x30] sm:$0xff] %v139
    %156 = vst [vmem:[#allocation2 + $0x38] sm:$0xff] %v140
    %157 = vst [vmem:[#allocation2 + $0x40] sm:$0xff] %v141
    %158 = vst [vmem:[#allocation2 + $0x48] sm:$0xff] %v142
    %159 = vst [vmem:[#allocation2 + $0x50] sm:$0xff] %v143
    %160 = vst [vmem:[#allocation2 + $0x58] sm:$0xff] %v144
    %161 = vst [vmem:[#allocation2 + $0x60] sm:$0xff] %v145
    %162 = vst [vmem:[#allocation2 + $0x68] sm:$0xff] %v146
    %163 = vst [vmem:[#allocation2 + $0x70] sm:$0xff] %v147
    %164 = vst [vmem:[#allocation2 + $0x78] sm:$0xff] %v148
    %v165 = vld [vmem:[#allocation2] sm:$0xff]
    %v166 = vld [vmem:[#allocation2 + $0x8] sm:$0xff]
    %v167 = vtanh.pop %v165
    %v168 = vtanh.pop %v166
    %v169 = vmul.f32 %v167, 0.5
    %v170 = vmul.f32 %v168, 0.5
    %v171 = vadd.f32 %v169, 0.5
    %v172 = vadd.f32 %v170, 0.5
    %v173 = vmul.f32 %v171, 0.0
    %v174 = vmul.f32 %v171, %v168
    %176 = vrot.lane.b32.xlu0 %v174, 64
    %v177 = vpop.permute.xlu0 %176
    %v179 = vadd.f32 %v173, %v177
    %v180 = vtanh.pop %v179
    %v181 = vmul.f32 %v172, %v180
    %183 = vrot.lane.b32.xlu0 %v181, 64
    %v184 = vpop.permute.xlu0 %183
    %vm186 = vcmask 261120
    %v187 = vsel %vm186, 0.0, %v184
    %189 = vrot.lane.b32.xlu0 %v179, 64
    %v190 = vpop.permute.xlu0 %189
    %v192 = vsel %vm186, 0.0, %v190
    %s193 = scalar_lea.vmem [#allocation2], 16
    %v194 = vld [vmem:[%s193] sm:$0xff]
    %v195 = vld [vmem:[%s193 + $0x8] sm:$0xff]
    %vm196 = vcmask 523264
    %v198 = vsel %vm196, %v187, 0
    %200 = vmatpush.msra.mxu0 0.0
    %201 = vmatpush.msra.mxu0 0.0
    %202 = vmatpush.msra.mxu0 0.0
    %203 = vmatpush.msra.mxu0 0.0
    %204 = vmatpush.msra.mxu0 0.0
    %205 = vmatpush.msra.mxu0 0.0
    %206 = vmatpush.msra.mxu0 0.0
    %207 = vmatpush.msra.mxu0 0.0
    %208 = vmatpush.msra.mxu0 %v55
    %209 = vmatpush.msra.mxu0 %v53
    %210 = vmatpush.msra.mxu0 %v51
    %211 = vmatpush.msra.mxu0 %v49
    %212 = vmatpush.msra.mxu0 %v47
    %213 = vmatpush.msra.mxu0 %v45
    %214 = vmatpush.msra.mxu0 %v43
    %215 = vmatpush.msra.mxu0 %v41
    %216 = vmatmul.f32.gmra.mxu0 %v198
    %v217 = vpop.f32.mrf.mxu0
    %v218 = vadd.f32 %v194, %v217
    %219 = vdwg.mxu0
    %220 = vmatpush.msra.mxu0 0.0
    %221 = vmatpush.msra.mxu0 0.0
    %222 = vmatpush.msra.mxu0 0.0
    %223 = vmatpush.msra.mxu0 0.0
    %224 = vmatpush.msra.mxu0 0.0
    %225 = vmatpush.msra.mxu0 0.0
    %226 = vmatpush.msra.mxu0 0.0
    %227 = vmatpush.msra.mxu0 0.0
    %228 = vmatpush.msra.mxu0 %v56
    %229 = vmatpush.msra.mxu0 %v54
    %230 = vmatpush.msra.mxu0 %v52
    %231 = vmatpush.msra.mxu0 %v50
    %232 = vmatpush.msra.mxu0 %v48
    %233 = vmatpush.msra.mxu0 %v46
    %234 = vmatpush.msra.mxu0 %v44
    %235 = vmatpush.msra.mxu0 %v42
    %236 = vmatmul.f32.gmra.mxu0 %v198
    %v237 = vpop.f32.mrf.mxu0
    %v238 = vadd.f32 %v195, %v237
    %239 = vdwg.mxu0
    %v240 = vtanh.pop %v218
    %v241 = vtanh.pop %v238
    %v242 = vmul.f32 %v240, 0.5
    %v243 = vmul.f32 %v241, 0.5
    %v244 = vadd.f32 %v242, 0.5
    %v245 = vadd.f32 %v243, 0.5
    %247 = vrot.lane.b32.xlu0 %v192, 64
    %v248 = vpop.permute.xlu0 %247
    %v250 = vmul.f32 %v244, %v248
    %v251 = vmul.f32 %v244, %v241
    %253 = vrot.lane.b32.xlu0 %v251, 64
    %v254 = vpop.permute.xlu0 %253
    %v256 = vadd.f32 %v250, %v254
    %v257 = vtanh.pop %v256
    %v258 = vmul.f32 %v245, %v257
    %s259 = scalar_lea.vmem [#allocation2], 32
    %v260 = vld [vmem:[%s259] sm:$0xff]
    %v261 = vld [vmem:[%s259 + $0x8] sm:$0xff]
    %263 = vrot.lane.b32.xlu0 %v258, 64
    %v264 = vpop.permute.xlu0 %263
    %v265 = vsel %vm196, %v264, 0
    %267 = vmatpush.msra.mxu0 0.0
    %268 = vmatpush.msra.mxu0 0.0
    %269 = vmatpush.msra.mxu0 0.0
    %270 = vmatpush.msra.mxu0 0.0
    %271 = vmatpush.msra.mxu0 0.0
    %272 = vmatpush.msra.mxu0 0.0
    %273 = vmatpush.msra.mxu0 0.0
    %274 = vmatpush.msra.mxu0 0.0
    %275 = vmatpush.msra.mxu0 %v55
    %276 = vmatpush.msra.mxu0 %v53
    %277 = vmatpush.msra.mxu0 %v51
    %278 = vmatpush.msra.mxu0 %v49
    %279 = vmatpush.msra.mxu0 %v47
    %280 = vmatpush.msra.mxu0 %v45
    %281 = vmatpush.msra.mxu0 %v43
    %282 = vmatpush.msra.mxu0 %v41
    %283 = vmatmul.f32.gmra.mxu0 %v265
    %v284 = vpop.f32.mrf.mxu0
    %v285 = vadd.f32 %v260, %v284
    %286 = vdwg.mxu0
    %287 = vmatpush.msra.mxu0 0.0
    %288 = vmatpush.msra.mxu0 0.0
    %289 = vmatpush.msra.mxu0 0.0
    %290 = vmatpush.msra.mxu0 0.0
    %291 = vmatpush.msra.mxu0 0.0
    %292 = vmatpush.msra.mxu0 0.0
    %293 = vmatpush.msra.mxu0 0.0
    %294 = vmatpush.msra.mxu0 0.0
    %295 = vmatpush.msra.mxu0 %v56
    %296 = vmatpush.msra.mxu0 %v54
    %297 = vmatpush.msra.mxu0 %v52
    %298 = vmatpush.msra.mxu0 %v50
    %299 = vmatpush.msra.mxu0 %v48
    %300 = vmatpush.msra.mxu0 %v46
    %301 = vmatpush.msra.mxu0 %v44
    %302 = vmatpush.msra.mxu0 %v42
    %303 = vmatmul.f32.gmra.mxu0 %v265
    %v304 = vpop.f32.mrf.mxu0
    %v305 = vadd.f32 %v261, %v304
    %306 = vdwg.mxu0
    %v307 = vtanh.pop %v285
    %v308 = vtanh.pop %v305
    %v309 = vmul.f32 %v307, 0.5
    %v310 = vmul.f32 %v308, 0.5
    %v311 = vadd.f32 %v309, 0.5
    %v312 = vadd.f32 %v310, 0.5
    %v313 = vmul.f32 %v311, %v256
    %v314 = vmul.f32 %v311, %v308
    %316 = vrot.lane.b32.xlu0 %v314, 64
    %v317 = vpop.permute.xlu0 %316
    %v319 = vadd.f32 %v313, %v317
    %v320 = vtanh.pop %v319
    %v321 = vmul.f32 %v312, %v320
    %s322 = scalar_lea.vmem [#allocation2], 48
    %v323 = vld [vmem:[%s322] sm:$0xff]
    %v324 = vld [vmem:[%s322 + $0x8] sm:$0xff]
    %326 = vrot.lane.b32.xlu0 %v321, 64
    %v327 = vpop.permute.xlu0 %326
    %v328 = vsel %vm196, %v327, 0
    %330 = vmatpush.msra.mxu0 0.0
    %331 = vmatpush.msra.mxu0 0.0
    %332 = vmatpush.msra.mxu0 0.0
    %333 = vmatpush.msra.mxu0 0.0
    %334 = vmatpush.msra.mxu0 0.0
    %335 = vmatpush.msra.mxu0 0.0
    %336 = vmatpush.msra.mxu0 0.0
    %337 = vmatpush.msra.mxu0 0.0
    %338 = vmatpush.msra.mxu0 %v55
    %339 = vmatpush.msra.mxu0 %v53
    %340 = vmatpush.msra.mxu0 %v51
    %341 = vmatpush.msra.mxu0 %v49
    %342 = vmatpush.msra.mxu0 %v47
    %343 = vmatpush.msra.mxu0 %v45
    %344 = vmatpush.msra.mxu0 %v43
    %345 = vmatpush.msra.mxu0 %v41
    %346 = vmatmul.f32.gmra.mxu0 %v328
    %v347 = vpop.f32.mrf.mxu0
    %v348 = vadd.f32 %v323, %v347
    %349 = vdwg.mxu0
    %350 = vmatpush.msra.mxu0 0.0
    %351 = vmatpush.msra.mxu0 0.0
    %352 = vmatpush.msra.mxu0 0.0
    %353 = vmatpush.msra.mxu0 0.0
    %354 = vmatpush.msra.mxu0 0.0
    %355 = vmatpush.msra.mxu0 0.0
    %356 = vmatpush.msra.mxu0 0.0
    %357 = vmatpush.msra.mxu0 0.0
    %358 = vmatpush.msra.mxu0 %v56
    %359 = vmatpush.msra.mxu0 %v54
    %360 = vmatpush.msra.mxu0 %v52
    %361 = vmatpush.msra.mxu0 %v50
    %362 = vmatpush.msra.mxu0 %v48
    %363 = vmatpush.msra.mxu0 %v46
    %364 = vmatpush.msra.mxu0 %v44
    %365 = vmatpush.msra.mxu0 %v42
    %366 = vmatmul.f32.gmra.mxu0 %v328
    %v367 = vpop.f32.mrf.mxu0
    %v368 = vadd.f32 %v324, %v367
    %369 = vdwg.mxu0
    %v370 = vtanh.pop %v348
    %v371 = vtanh.pop %v368
    %v372 = vmul.f32 %v370, 0.5
    %v373 = vmul.f32 %v371, 0.5
    %v374 = vadd.f32 %v372, 0.5
    %v375 = vadd.f32 %v373, 0.5
    %v376 = vmul.f32 %v374, %v319
    %v377 = vmul.f32 %v374, %v371
    %379 = vrot.lane.b32.xlu0 %v377, 64
    %v380 = vpop.permute.xlu0 %379
    %v382 = vadd.f32 %v376, %v380
    %v383 = vtanh.pop %v382
    %v384 = vmul.f32 %v375, %v383
    %s385 = scalar_lea.vmem [#allocation2], 64
    %v386 = vld [vmem:[%s385] sm:$0xff]
    %v387 = vld [vmem:[%s385 + $0x8] sm:$0xff]
    %389 = vrot.lane.b32.xlu0 %v384, 64
    %v390 = vpop.permute.xlu0 %389
    %v391 = vsel %vm196, %v390, 0
    %393 = vmatpush.msra.mxu0 0.0
    %394 = vmatpush.msra.mxu0 0.0
    %395 = vmatpush.msra.mxu0 0.0
    %396 = vmatpush.msra.mxu0 0.0
    %397 = vmatpush.msra.mxu0 0.0
    %398 = vmatpush.msra.mxu0 0.0
    %399 = vmatpush.msra.mxu0 0.0
    %400 = vmatpush.msra.mxu0 0.0
    %401 = vmatpush.msra.mxu0 %v55
    %402 = vmatpush.msra.mxu0 %v53
    %403 = vmatpush.msra.mxu0 %v51
    %404 = vmatpush.msra.mxu0 %v49
    %405 = vmatpush.msra.mxu0 %v47
    %406 = vmatpush.msra.mxu0 %v45
    %407 = vmatpush.msra.mxu0 %v43
    %408 = vmatpush.msra.mxu0 %v41
    %409 = vmatmul.f32.gmra.mxu0 %v391
    %v410 = vpop.f32.mrf.mxu0
    %v411 = vadd.f32 %v386, %v410
    %412 = vdwg.mxu0
    %413 = vmatpush.msra.mxu0 0.0
    %414 = vmatpush.msra.mxu0 0.0
    %415 = vmatpush.msra.mxu0 0.0
    %416 = vmatpush.msra.mxu0 0.0
    %417 = vmatpush.msra.mxu0 0.0
    %418 = vmatpush.msra.mxu0 0.0
    %419 = vmatpush.msra.mxu0 0.0
    %420 = vmatpush.msra.mxu0 0.0
    %421 = vmatpush.msra.mxu0 %v56
    %422 = vmatpush.msra.mxu0 %v54
    %423 = vmatpush.msra.mxu0 %v52
    %424 = vmatpush.msra.mxu0 %v50
    %425 = vmatpush.msra.mxu0 %v48
    %426 = vmatpush.msra.mxu0 %v46
    %427 = vmatpush.msra.mxu0 %v44
    %428 = vmatpush.msra.mxu0 %v42
    %429 = vmatmul.f32.gmra.mxu0 %v391
    %v430 = vpop.f32.mrf.mxu0
    %v431 = vadd.f32 %v387, %v430
    %432 = vdwg.mxu0
    %v433 = vtanh.pop %v411
    %v434 = vtanh.pop %v431
    %v435 = vmul.f32 %v433, 0.5
    %v436 = vmul.f32 %v434, 0.5
    %v437 = vadd.f32 %v435, 0.5
    %v438 = vadd.f32 %v436, 0.5
    %v439 = vmul.f32 %v437, %v382
    %v440 = vmul.f32 %v437, %v434
    %442 = vrot.lane.b32.xlu0 %v440, 64
    %v443 = vpop.permute.xlu0 %442
    %v445 = vadd.f32 %v439, %v443
    %v446 = vtanh.pop %v445
    %v447 = vmul.f32 %v438, %v446
    %s448 = scalar_lea.vmem [#allocation2], 80
    %v449 = vld [vmem:[%s448] sm:$0xff]
    %v450 = vld [vmem:[%s448 + $0x8] sm:$0xff]
    %452 = vrot.lane.b32.xlu0 %v447, 64
    %v453 = vpop.permute.xlu0 %452
    %v454 = vsel %vm196, %v453, 0
    %456 = vmatpush.msra.mxu0 0.0
    %457 = vmatpush.msra.mxu0 0.0
    %458 = vmatpush.msra.mxu0 0.0
    %459 = vmatpush.msra.mxu0 0.0
    %460 = vmatpush.msra.mxu0 0.0
    %461 = vmatpush.msra.mxu0 0.0
    %462 = vmatpush.msra.mxu0 0.0
    %463 = vmatpush.msra.mxu0 0.0
    %464 = vmatpush.msra.mxu0 %v55
    %465 = vmatpush.msra.mxu0 %v53
    %466 = vmatpush.msra.mxu0 %v51
    %467 = vmatpush.msra.mxu0 %v49
    %468 = vmatpush.msra.mxu0 %v47
    %469 = vmatpush.msra.mxu0 %v45
    %470 = vmatpush.msra.mxu0 %v43
    %471 = vmatpush.msra.mxu0 %v41
    %472 = vmatmul.f32.gmra.mxu0 %v454
    %v473 = vpop.f32.mrf.mxu0
    %v474 = vadd.f32 %v449, %v473
    %475 = vdwg.mxu0
    %476 = vmatpush.msra.mxu0 0.0
    %477 = vmatpush.msra.mxu0 0.0
    %478 = vmatpush.msra.mxu0 0.0
    %479 = vmatpush.msra.mxu0 0.0
    %480 = vmatpush.msra.mxu0 0.0
    %481 = vmatpush.msra.mxu0 0.0
    %482 = vmatpush.msra.mxu0 0.0
    %483 = vmatpush.msra.mxu0 0.0
    %484 = vmatpush.msra.mxu0 %v56
    %485 = vmatpush.msra.mxu0 %v54
    %486 = vmatpush.msra.mxu0 %v52
    %487 = vmatpush.msra.mxu0 %v50
    %488 = vmatpush.msra.mxu0 %v48
    %489 = vmatpush.msra.mxu0 %v46
    %490 = vmatpush.msra.mxu0 %v44
    %491 = vmatpush.msra.mxu0 %v42
    %492 = vmatmul.f32.gmra.mxu0 %v454
    %v493 = vpop.f32.mrf.mxu0
    %v494 = vadd.f32 %v450, %v493
    %495 = vdwg.mxu0
    %v496 = vtanh.pop %v474
    %v497 = vtanh.pop %v494
    %v498 = vmul.f32 %v496, 0.5
    %v499 = vmul.f32 %v497, 0.5
    %v500 = vadd.f32 %v498, 0.5
    %v501 = vadd.f32 %v499, 0.5
    %v502 = vmul.f32 %v500, %v445
    %v503 = vmul.f32 %v500, %v497
    %505 = vrot.lane.b32.xlu0 %v503, 64
    %v506 = vpop.permute.xlu0 %505
    %v508 = vadd.f32 %v502, %v506
    %v509 = vtanh.pop %v508
    %v510 = vmul.f32 %v501, %v509
    %s511 = scalar_lea.vmem [#allocation2], 96
    %v512 = vld [vmem:[%s511] sm:$0xff]
    %v513 = vld [vmem:[%s511 + $0x8] sm:$0xff]
    %515 = vrot.lane.b32.xlu0 %v510, 64
    %v516 = vpop.permute.xlu0 %515
    %v517 = vsel %vm196, %v516, 0
    %519 = vmatpush.msra.mxu0 0.0
    %520 = vmatpush.msra.mxu0 0.0
    %521 = vmatpush.msra.mxu0 0.0
    %522 = vmatpush.msra.mxu0 0.0
    %523 = vmatpush.msra.mxu0 0.0
    %524 = vmatpush.msra.mxu0 0.0
    %525 = vmatpush.msra.mxu0 0.0
    %526 = vmatpush.msra.mxu0 0.0
    %527 = vmatpush.msra.mxu0 %v55
    %528 = vmatpush.msra.mxu0 %v53
    %529 = vmatpush.msra.mxu0 %v51
    %530 = vmatpush.msra.mxu0 %v49
    %531 = vmatpush.msra.mxu0 %v47
    %532 = vmatpush.msra.mxu0 %v45
    %533 = vmatpush.msra.mxu0 %v43
    %534 = vmatpush.msra.mxu0 %v41
    %535 = vmatmul.f32.gmra.mxu0 %v517
    %v536 = vpop.f32.mrf.mxu0
    %v537 = vadd.f32 %v512, %v536
    %538 = vdwg.mxu0
    %539 = vmatpush.msra.mxu0 0.0
    %540 = vmatpush.msra.mxu0 0.0
    %541 = vmatpush.msra.mxu0 0.0
    %542 = vmatpush.msra.mxu0 0.0
    %543 = vmatpush.msra.mxu0 0.0
    %544 = vmatpush.msra.mxu0 0.0
    %545 = vmatpush.msra.mxu0 0.0
    %546 = vmatpush.msra.mxu0 0.0
    %547 = vmatpush.msra.mxu0 %v56
    %548 = vmatpush.msra.mxu0 %v54
    %549 = vmatpush.msra.mxu0 %v52
    %550 = vmatpush.msra.mxu0 %v50
    %551 = vmatpush.msra.mxu0 %v48
    %552 = vmatpush.msra.mxu0 %v46
    %553 = vmatpush.msra.mxu0 %v44
    %554 = vmatpush.msra.mxu0 %v42
    %555 = vmatmul.f32.gmra.mxu0 %v517
    %v556 = vpop.f32.mrf.mxu0
    %v557 = vadd.f32 %v513, %v556
    %558 = vdwg.mxu0
    %v559 = vtanh.pop %v537
    %v560 = vtanh.pop %v557
    %v561 = vmul.f32 %v559, 0.5
    %v562 = vmul.f32 %v560, 0.5
    %v563 = vadd.f32 %v561, 0.5
    %v564 = vadd.f32 %v562, 0.5
    %v565 = vmul.f32 %v563, %v508
    %v566 = vmul.f32 %v563, %v560
    %568 = vrot.lane.b32.xlu0 %v566, 64
    %v569 = vpop.permute.xlu0 %568
    %v571 = vadd.f32 %v565, %v569
    %v572 = vtanh.pop %v571
    %v573 = vmul.f32 %v564, %v572
    %s574 = scalar_lea.vmem [#allocation2], 112
    %v575 = vld [vmem:[%s574] sm:$0xff]
    %v576 = vld [vmem:[%s574 + $0x8] sm:$0xff]
    %578 = vrot.lane.b32.xlu0 %v573, 64
    %v579 = vpop.permute.xlu0 %578
    %v580 = vsel %vm196, %v579, 0
    %582 = vmatpush.msra.mxu0 0.0
    %583 = vmatpush.msra.mxu0 0.0
    %584 = vmatpush.msra.mxu0 0.0
    %585 = vmatpush.msra.mxu0 0.0
    %586 = vmatpush.msra.mxu0 0.0
    %587 = vmatpush.msra.mxu0 0.0
    %588 = vmatpush.msra.mxu0 0.0
    %589 = vmatpush.msra.mxu0 0.0
    %590 = vmatpush.msra.mxu0 %v55
    %591 = vmatpush.msra.mxu0 %v53
    %592 = vmatpush.msra.mxu0 %v51
    %593 = vmatpush.msra.mxu0 %v49
    %594 = vmatpush.msra.mxu0 %v47
    %595 = vmatpush.msra.mxu0 %v45
    %596 = vmatpush.msra.mxu0 %v43
    %597 = vmatpush.msra.mxu0 %v41
    %598 = vmatmul.f32.gmra.mxu0 %v580
    %v599 = vpop.f32.mrf.mxu0
    %v600 = vadd.f32 %v575, %v599
    %601 = vdwg.mxu0
    %602 = vmatpush.msra.mxu0 0.0
    %603 = vmatpush.msra.mxu0 0.0
    %604 = vmatpush.msra.mxu0 0.0
    %605 = vmatpush.msra.mxu0 0.0
    %606 = vmatpush.msra.mxu0 0.0
    %607 = vmatpush.msra.mxu0 0.0
    %608 = vmatpush.msra.mxu0 0.0
    %609 = vmatpush.msra.mxu0 0.0
    %610 = vmatpush.msra.mxu0 %v56
    %611 = vmatpush.msra.mxu0 %v54
    %612 = vmatpush.msra.mxu0 %v52
    %613 = vmatpush.msra.mxu0 %v50
    %614 = vmatpush.msra.mxu0 %v48
    %615 = vmatpush.msra.mxu0 %v46
    %616 = vmatpush.msra.mxu0 %v44
    %617 = vmatpush.msra.mxu0 %v42
    %618 = vmatmul.f32.gmra.mxu0 %v580
    %v619 = vpop.f32.mrf.mxu0
    %v620 = vadd.f32 %v576, %v619
    %621 = vdwg.mxu0
    %v622 = vtanh.pop %v600
    %v623 = vtanh.pop %v620
    %v624 = vmul.f32 %v622, 0.5
    %v625 = vmul.f32 %v623, 0.5
    %v626 = vadd.f32 %v624, 0.5
    %v627 = vadd.f32 %v625, 0.5
    %v628 = vmul.f32 %v626, %v571
    %v629 = vmul.f32 %v626, %v623
    %631 = vrot.lane.b32.xlu0 %v629, 64
    %v632 = vpop.permute.xlu0 %631
    %v634 = vadd.f32 %v628, %v632
    %v635 = vtanh.pop %v634
    %v636 = vmul.f32 %v627, %v635
    %638 = vrot.lane.b32.xlu0 %v636, 64
    %v639 = vpop.permute.xlu0 %638
    %v640 = vsel %vm196, %v639, 0
    %642 = vmatpush.msra.mxu0 0.0
    %643 = vmatpush.msra.mxu0 0.0
    %644 = vmatpush.msra.mxu0 0.0
    %645 = vmatpush.msra.mxu0 0.0
    %646 = vmatpush.msra.mxu0 0.0
    %647 = vmatpush.msra.mxu0 0.0
    %648 = vmatpush.msra.mxu0 0.0
    %649 = vmatpush.msra.mxu0 0.0
    %650 = vmatpush.msra.mxu0 %v55
    %651 = vmatpush.msra.mxu0 %v53
    %652 = vmatpush.msra.mxu0 %v51
    %653 = vmatpush.msra.mxu0 %v49
    %654 = vmatpush.msra.mxu0 %v47
    %655 = vmatpush.msra.mxu0 %v45
    %656 = vmatpush.msra.mxu0 %v43
    %657 = vmatpush.msra.mxu0 %v41
    %658 = vmatmul.f32.gmra.mxu0 %v640
    %v659 = vpop.f32.mrf.mxu0
    %v660 = vadd.f32 %v129, %v659
    %661 = vdwg.mxu0
    %662 = vmatpush.msra.mxu0 0.0
    %663 = vmatpush.msra.mxu0 0.0
    %664 = vmatpush.msra.mxu0 0.0
    %665 = vmatpush.msra.mxu0 0.0
    %666 = vmatpush.msra.mxu0 0.0
    %667 = vmatpush.msra.mxu0 0.0
    %668 = vmatpush.msra.mxu0 0.0
    %669 = vmatpush.msra.mxu0 0.0
    %670 = vmatpush.msra.mxu0 %v56
    %671 = vmatpush.msra.mxu0 %v54
    %672 = vmatpush.msra.mxu0 %v52
    %673 = vmatpush.msra.mxu0 %v50
    %674 = vmatpush.msra.mxu0 %v48
    %675 = vmatpush.msra.mxu0 %v46
    %676 = vmatpush.msra.mxu0 %v44
    %677 = vmatpush.msra.mxu0 %v42
    %678 = vmatmul.f32.gmra.mxu0 %v640
    %v679 = vpop.f32.mrf.mxu0
    %v680 = vadd.f32 %v130, %v679
    %681 = vdwg.mxu0
    %v682 = vtanh.pop %v660
    %v683 = vtanh.pop %v680
    %v684 = vmul.f32 %v682, 0.5
    %v685 = vmul.f32 %v683, 0.5
    %v686 = vadd.f32 %v684, 0.5
    %v687 = vadd.f32 %v685, 0.5
    %v688 = vmul.f32 %v686, %v634
    %v689 = vmul.f32 %v686, %v683
    %691 = vrot.lane.b32.xlu0 %v689, 64
    %v692 = vpop.permute.xlu0 %691
    %v694 = vadd.f32 %v688, %v692
    %v695 = vtanh.pop %v694
    %v696 = vmul.f32 %v687, %v695
    %v697 = vld [vmem:[%s4] sm:$0xff]
    %v698 = vld [vmem:[%s4 + $0x8] sm:$0xff]
    %v699 = vld [vmem:[%s4 + $0x10] sm:$0xff]
    %v700 = vld [vmem:[%s4 + $0x18] sm:$0xff]
    %v701 = vld [vmem:[#allocation3] sm:$0x1]
    %v703 = vperm.slane %v701, 0
    %706 = vrot.lane.b32.xlu0 %v696, 64
    %v707 = vpop.permute.xlu0 %706
    %v708 = vsel %vm186, %v707, 0
    %710 = vmatpush.msra.mxu0 0.0
    %711 = vmatpush.msra.mxu0 0.0
    %712 = vmatpush.msra.mxu0 0.0
    %713 = vmatpush.msra.mxu0 0.0
    %714 = vmatpush.msra.mxu0 0.0
    %715 = vmatpush.msra.mxu0 0.0
    %716 = vmatpush.msra.mxu0 0.0
    %717 = vmatpush.msra.mxu0 0.0
    %718 = vmatpush.msra.mxu0 0.0
    %719 = vmatpush.msra.mxu0 0.0
    %720 = vmatpush.msra.mxu0 0.0
    %721 = vmatpush.msra.mxu0 0.0
    %722 = vmatpush.msra.mxu0 %v700
    %723 = vmatpush.msra.mxu0 %v699
    %724 = vmatpush.msra.mxu0 %v698
    %725 = vmatpush.msra.mxu0 %v697
    %726 = vmatmul.f32.gmra.mxu0 %v708
    %v727 = vpop.f32.mrf.mxu0
    %v728 = vadd.f32 %v703, %v727
    %729 = vdwg.mxu0
    %vm730 = vcmask 7168
    %731 = vst.msk [vmem:[%s6] sm:$0xff] %vm730, %v728
    // Predicated region
    $region30: #{tpu_custom_call.1} parent=1 // pred_check
      _
    $region31: #{tpu_custom_call.1} parent=1 // pred_check_branch
      %733 = sbr.rel (0) target = $region33
    $region32: #{tpu_custom_call.1} parent=1 // pred_region
      _
    $region33: #{tpu_custom_call.1} parent=1 // pred_fallthru
      _
    // Predicated region
    $region34: #{tpu_custom_call.1} parent=1 // pred_check
      _
    $region35: #{tpu_custom_call.1} parent=1 // pred_check_branch
      %735 = sbr.rel (0) target = $region37
    $region36: #{tpu_custom_call.1} parent=1 // pred_region
      _
    $region37: #{tpu_custom_call.1} parent=1 // pred_fallthru
      _
    %736 = vsyncpa [#allocation5], 1

</llo_original>
